<compile_context>
chip_gen: v7x
topology: tpu7x:2x2x1
jax: 0.10.0
libtpu: 0.0.40
codegen_flags: <defaults>
</compile_context>

<pallas_src>
import functools

import jax
import jax.numpy as jnp
from jax.experimental import pallas as pl
from jax.experimental.pallas import tpu as pltpu


def _encoder_kernel(x_ref, w1_ref, b1_ref, w2_ref, b2_ref, out_ref, *, Dz):
    # Hidden layer: tanh(x @ W1 + b1) -> [TB, H]
    h = jnp.tanh(
        jnp.dot(x_ref[...], w1_ref[...], preferred_element_type=jnp.float32)
        + b1_ref[...]
    )
    # Fused second layer: one matmul -> [TB, 2*Dz]
    res = (
        jnp.dot(h, w2_ref[...], preferred_element_type=jnp.float32)
        + b2_ref[...]
    )
    # tanh on the first Dz lanes (mean), exp on the last Dz lanes (var).
    lane = jax.lax.broadcasted_iota(jnp.int32, res.shape, dimension=1)
    out_ref[...] = jnp.where(lane < Dz, jnp.tanh(res), jnp.exp(res))


def encoder_forward(x, w1, b1, w2, b2, Dz, *, block_b=512):
    """x: [B, Dx]; w1: [Dx, H]; b1: [H]; w2: [H, 2*Dz]; b2: [2*Dz].

    Returns (mean [B, Dz], var [B, Dz]).  For IWAE, fold importance samples
    into B before calling so the MXU M dimension is filled.
    """
    B, Dx = x.shape
    H = w1.shape[1]
    Do = 2 * Dz
    assert w2.shape == (H, Do) and b2.shape == (Do,)

    # Row-tile: multiple of 8 sublanes, capped at block_b; pad B up to it.
    TB = min(block_b, ((B + 7) // 8) * 8)
    B_pad = ((B + TB - 1) // TB) * TB
    if B_pad != B:
        x = jnp.pad(x, ((0, B_pad - B), (0, 0)))

    # Bias reshapes are cheap glue; in a real model do these once at setup.
    b1_2d = b1.reshape(1, H)
    b2_2d = b2.reshape(1, Do)

    grid = (pl.cdiv(B_pad, TB),)

    cost = pl.CostEstimate(
        flops=2 * B_pad * (Dx * H + H * Do),
        transcendentals=B_pad * (H + Do),
        bytes_accessed=4 * (B_pad * Dx + Dx * H + H + H * Do + Do + B_pad * Do),
    )

    out = pl.pallas_call(
        functools.partial(_encoder_kernel, Dz=Dz),
        out_shape=jax.ShapeDtypeStruct((B_pad, Do), jnp.float32),
        grid=grid,
        in_specs=[
            pl.BlockSpec((TB, Dx), lambda i: (i, 0)),   # x tile, pipelined
            pl.BlockSpec((Dx, H), lambda i: (0, 0)),    # W1, VMEM-resident
            pl.BlockSpec((1, H), lambda i: (0, 0)),     # b1
            pl.BlockSpec((H, Do), lambda i: (0, 0)),    # W2 (fused mean|var)
            pl.BlockSpec((1, Do), lambda i: (0, 0)),    # b2
        ],
        out_specs=pl.BlockSpec((TB, Do), lambda i: (i, 0)),
        compiler_params=pltpu.CompilerParams(
            dimension_semantics=("parallel",),
        ),
        cost_estimate=cost,
    )(x, w1, b1_2d, w2, b2_2d)

    out = out[:B]
    return out[:, :Dz], out[:, Dz:]


def encoder_reference(x, w1, b1, w2, b2, Dz):
    h = jnp.tanh(x @ w1 + b1)
    res = h @ w2 + b2
    return jnp.tanh(res[:, :Dz]), jnp.exp(res[:, Dz:])


if __name__ == "__main__":
    B, Dx, Dz, H = 8, 32, 8, 500

    key = jax.random.PRNGKey(0)
    kx, k1, k2, k3, k4 = jax.random.split(key, 5)

    # Deterministic synthetic parameters (PyTorch-like uniform fan-in init).
    x = jax.random.normal(kx, (B, Dx), dtype=jnp.float32)
    lim1 = 1.0 / jnp.sqrt(Dx)
    w1 = jax.random.uniform(k1, (Dx, H), minval=-lim1, maxval=lim1, dtype=jnp.float32)
    b1 = jax.random.uniform(k2, (H,), minval=-lim1, maxval=lim1, dtype=jnp.float32)
    lim2 = 1.0 / jnp.sqrt(H)
    w2 = jax.random.uniform(k3, (H, 2 * Dz), minval=-lim2, maxval=lim2, dtype=jnp.float32)
    b2 = jax.random.uniform(k4, (2 * Dz,), minval=-lim2, maxval=lim2, dtype=jnp.float32)

    mean, var = encoder_forward(x, w1, b1, w2, b2, Dz)
    jax.block_until_ready((mean, var))

    mean_ref, var_ref = encoder_reference(x, w1, b1, w2, b2, Dz)

    assert mean.shape == (B, Dz) and var.shape == (B, Dz)
    assert jnp.allclose(mean, mean_ref, atol=1e-5, rtol=1e-5)
    assert jnp.allclose(var, var_ref, atol=1e-5, rtol=1e-5)

    print("KERNEL_OK")
</pallas_src>

<mosaic_0001>
module attributes {stable_mosaic.version = 11 : i64} {
  func.func @_encoder_kernel(%arg0: i32, %arg1: memref<8x32xf32, #tpu.memory_space<vmem>>, %arg2: memref<32x500xf32, #tpu.memory_space<vmem>>, %arg3: memref<1x500xf32, #tpu.memory_space<vmem>>, %arg4: memref<500x16xf32, #tpu.memory_space<vmem>>, %arg5: memref<1x16xf32, #tpu.memory_space<vmem>>, %arg6: memref<8x16xf32, #tpu.memory_space<vmem>>) attributes {dimension_semantics = [#tpu.dimension_semantics<parallel>], iteration_bounds = array<i64: 1>, scalar_prefetch = 0 : i64, scratch_operands = 0 : i64, tpu.core_type = #tpu.core_type<tc>, window_params = [{transform_indices = @transform_0, window_bounds = array<i64: 8, 32>}, {pipeline_mode = #tpu.pipeline_mode<synchronous>, transform_indices = @transform_1, window_bounds = array<i64: 32, 500>}, {pipeline_mode = #tpu.pipeline_mode<synchronous>, transform_indices = @transform_2, window_bounds = array<i64: 1, 500>}, {pipeline_mode = #tpu.pipeline_mode<synchronous>, transform_indices = @transform_3, window_bounds = array<i64: 500, 16>}, {pipeline_mode = #tpu.pipeline_mode<synchronous>, transform_indices = @transform_4, window_bounds = array<i64: 1, 16>}, {transform_indices = @transform_5, window_bounds = array<i64: 8, 16>}]} {
    %c0 = arith.constant 0 : index
    %c0_0 = arith.constant 0 : index
    %0 = vector.load %arg1[%c0, %c0_0] : memref<8x32xf32, #tpu.memory_space<vmem>>, vector<8x32xf32>
    %c0_1 = arith.constant 0 : index
    %c0_2 = arith.constant 0 : index
    %1 = vector.load %arg2[%c0_1, %c0_2] : memref<32x500xf32, #tpu.memory_space<vmem>>, vector<32x500xf32>
    %cst = arith.constant dense<0.000000e+00> : vector<8x500xf32>
    %2 = tpu.matmul %0, %1, %cst {dimension_numbers = #tpu.dot_dimension_numbers<[1], [0], [0], [1], [0, 0, 1, 1], [], []>} : vector<8x32xf32>, vector<32x500xf32>, vector<8x500xf32> -> vector<8x500xf32>
    %c0_3 = arith.constant 0 : index
    %c0_4 = arith.constant 0 : index
    %3 = vector.load %arg3[%c0_3, %c0_4] : memref<1x500xf32, #tpu.memory_space<vmem>>, vector<1x500xf32>
    %4 = vector.broadcast %3 : vector<1x500xf32> to vector<8x500xf32>
    %5 = arith.addf %2, %4 : vector<8x500xf32>
    %6 = math.tanh %5 : vector<8x500xf32>
    %c0_5 = arith.constant 0 : index
    %c0_6 = arith.constant 0 : index
    %7 = vector.load %arg4[%c0_5, %c0_6] : memref<500x16xf32, #tpu.memory_space<vmem>>, vector<500x16xf32>
    %cst_7 = arith.constant dense<0.000000e+00> : vector<8x16xf32>
    %8 = tpu.matmul %6, %7, %cst_7 {dimension_numbers = #tpu.dot_dimension_numbers<[1], [0], [0], [1], [0, 0, 1, 1], [], []>} : vector<8x500xf32>, vector<500x16xf32>, vector<8x16xf32> -> vector<8x16xf32>
    %c0_8 = arith.constant 0 : index
    %c0_9 = arith.constant 0 : index
    %9 = vector.load %arg5[%c0_8, %c0_9] : memref<1x16xf32, #tpu.memory_space<vmem>>, vector<1x16xf32>
    %10 = vector.broadcast %9 : vector<1x16xf32> to vector<8x16xf32>
    %11 = arith.addf %8, %10 : vector<8x16xf32>
    %12 = tpu.iota {dimensions = array<i32: 1>} : vector<8x16xi32>
    %c8_i32 = arith.constant 8 : i32
    %13 = vector.broadcast %c8_i32 : i32 to vector<8x16xi32>
    %14 = arith.cmpi slt, %12, %13 : vector<8x16xi32>
    %15 = math.tanh %11 : vector<8x16xf32>
    %16 = math.exp %11 : vector<8x16xf32>
    %17 = arith.select %14, %15, %16 : vector<8x16xi1>, vector<8x16xf32>
    %c0_10 = arith.constant 0 : index
    %c0_11 = arith.constant 0 : index
    %18 = vector.load %arg6[%c0_10, %c0_11] : memref<8x16xf32, #tpu.memory_space<vmem>>, vector<8x16xf32>
    tpu.vector_store %arg6[%c0_10, %c0_11], %17 {strides = array<i32>} : memref<8x16xf32, #tpu.memory_space<vmem>>, vector<8x16xf32>,
    return
  }
  func.func @transform_0(%arg0: i32) -> (i32, i32) {
    %c0_i32 = arith.constant 0 : i32
    %c0_i32_0 = arith.constant 0 : i32
    return %arg0, %c0_i32 : i32, i32
  }
  func.func @transform_1(%arg0: i32) -> (i32, i32) {
    %c0_i32 = arith.constant 0 : i32
    %c0_i32_0 = arith.constant 0 : i32
    %c0_i32_1 = arith.constant 0 : i32
    return %c0_i32, %c0_i32_0 : i32, i32
  }
  func.func @transform_2(%arg0: i32) -> (i32, i32) {
    %c0_i32 = arith.constant 0 : i32
    %c0_i32_0 = arith.constant 0 : i32
    %c0_i32_1 = arith.constant 0 : i32
    return %c0_i32, %c0_i32_0 : i32, i32
  }
  func.func @transform_3(%arg0: i32) -> (i32, i32) {
    %c0_i32 = arith.constant 0 : i32
    %c0_i32_0 = arith.constant 0 : i32
    %c0_i32_1 = arith.constant 0 : i32
    return %c0_i32, %c0_i32_0 : i32, i32
  }
  func.func @transform_4(%arg0: i32) -> (i32, i32) {
    %c0_i32 = arith.constant 0 : i32
    %c0_i32_0 = arith.constant 0 : i32
    %c0_i32_1 = arith.constant 0 : i32
    return %c0_i32, %c0_i32_0 : i32, i32
  }
  func.func @transform_5(%arg0: i32) -> (i32, i32) {
    %c0_i32 = arith.constant 0 : i32
    %c0_i32_0 = arith.constant 0 : i32
    return %arg0, %c0_i32 : i32, i32
  }
}

</mosaic_0001>

<llo_original>
// kernel: tpu_custom_call.1
$region0: #{tpu_custom_call.1}
  #allocation0 [shape = 'u32[]', space=smem, size = 0x4, offset = 0x4, fixed_abs, tag = 'smem constant byte address 0x4 - core index']
  #allocation1 [shape = 'u32[144,128]{1,0:T(1,128)}', space=vmem, size = 0x12000, scoped, tag = 'internal scratch']
  %s0 = inlined_call_operand.vmem [shape: f32[8,32], index: 0, kind: input, shape index: {}]
  %s1 = inlined_call_operand.vmem [shape: f32[32,500], index: 1, kind: input, shape index: {}]
  %s2 = inlined_call_operand.vmem [shape: f32[1,500], index: 2, kind: input, shape index: {}]
  %s3 = inlined_call_operand.vmem [shape: f32[500,16], index: 3, kind: input, shape index: {}]
  %s4 = inlined_call_operand.vmem [shape: f32[1,16], index: 4, kind: input, shape index: {}]
  %s5 = inlined_call_operand.hbm [shape: f32[8,16], index: 5, kind: output, shape index: {}]
  %s6 = sld [smem:[#allocation0]]
  $region30: #{tpu_custom_call.1} parent=0
    _
  %s8 = ssub.s32 1, %s6
  %s9 = scalar_select 0, %s8, %s6
  $region1: #{tpu_custom_call.1} parent=0
    #allocation2 [shape = 'u8[4096]{0}', space=vmem, size = 0x1000, scoped, tag = 'output window, operand 0, single buffered']
    #allocation3 [shape = 's32[1]{0}', space=sflag, size = 0x4, scoped, tag = 'scoped memory for tpu_custom_call.1']
    %10 = vsyncpa [#allocation3], 0
    // Predicated region
    $region2: #{tpu_custom_call.1} parent=1 // pred_check
      _
    $region3: #{tpu_custom_call.1} parent=1 // pred_check_branch
      %12 = sbr.rel (0) target = $region5
    $region4: #{tpu_custom_call.1} parent=1 // pred_region
      _
    $region5: #{tpu_custom_call.1} parent=1 // pred_fallthru
      _
    // Predicated region
    $region6: #{tpu_custom_call.1} parent=1 // pred_check
      _
    $region7: #{tpu_custom_call.1} parent=1 // pred_check_branch
      %14 = sbr.rel (0) target = $region9
    $region8: #{tpu_custom_call.1} parent=1 // pred_region
      _
    $region9: #{tpu_custom_call.1} parent=1 // pred_fallthru
      _
    // Predicated region
    $region10: #{tpu_custom_call.1} parent=1 // pred_check
      _
    $region11: #{tpu_custom_call.1} parent=1 // pred_check_branch
      %16 = sbr.rel (0) target = $region13
    $region12: #{tpu_custom_call.1} parent=1 // pred_region
      _
    $region13: #{tpu_custom_call.1} parent=1 // pred_fallthru
      _
    // Predicated region
    $region14: #{tpu_custom_call.1} parent=1 // pred_check
      _
    $region15: #{tpu_custom_call.1} parent=1 // pred_check_branch
      %18 = sbr.rel (0) target = $region17
    $region16: #{tpu_custom_call.1} parent=1 // pred_region
      _
    $region17: #{tpu_custom_call.1} parent=1 // pred_fallthru
      _
    // Predicated region
    $region18: #{tpu_custom_call.1} parent=1 // pred_check
      _
    $region19: #{tpu_custom_call.1} parent=1 // pred_check_branch
      %20 = sbr.rel (0) target = $region21
    $region20: #{tpu_custom_call.1} parent=1 // pred_region
      _
    $region21: #{tpu_custom_call.1} parent=1 // pred_fallthru
      _
    %v21 = vld [vmem:[%s0] sm:$0xff]
    %v22 = vld [vmem:[%s1] sm:$0xff]
    %v23 = vld [vmem:[%s1 + $0x8] sm:$0xff]
    %v24 = vld [vmem:[%s1 + $0x10] sm:$0xff]
    %v25 = vld [vmem:[%s1 + $0x18] sm:$0xff]
    %v26 = vld [vmem:[%s1 + $0x20] sm:$0xff]
    %v27 = vld [vmem:[%s1 + $0x28] sm:$0xff]
    %v28 = vld [vmem:[%s1 + $0x30] sm:$0xff]
    %v29 = vld [vmem:[%s1 + $0x38] sm:$0xff]
    %v30 = vld [vmem:[%s1 + $0x40] sm:$0xff]
    %v31 = vld [vmem:[%s1 + $0x48] sm:$0xff]
    %v32 = vld [vmem:[%s1 + $0x50] sm:$0xff]
    %v33 = vld [vmem:[%s1 + $0x58] sm:$0xff]
    %v34 = vld [vmem:[%s1 + $0x60] sm:$0xff]
    %v35 = vld [vmem:[%s1 + $0x68] sm:$0xff]
    %v36 = vld [vmem:[%s1 + $0x70] sm:$0xff]
    %v37 = vld [vmem:[%s1 + $0x78] sm:$0xff]
    %v38 = vld [vmem:[%s2] sm:$0xf]
    %v40 = vlaneseq
    %v41 = vshrl.u32 %v40, 7
    %v42 = vsub.s32 0, %v41
    %v43 = vrot.slane %v38, %v42
    %v44 = vlaneseq
    %v45 = vshrl.u32 %v44, 7
    %v46 = vsub.s32 1, %v45
    %v47 = vrot.slane %v38, %v46
    %v48 = vlaneseq
    %v49 = vshrl.u32 %v48, 7
    %v50 = vsub.s32 2, %v49
    %v51 = vrot.slane %v38, %v50
    %v52 = vlaneseq
    %v53 = vshrl.u32 %v52, 7
    %v54 = vsub.s32 3, %v53
    %v55 = vrot.slane %v38, %v54
    %vm60 = vcmask 261120
    %v62 = vsel %vm60, %v21, 0
    %64 = vmatprep.subr.mxu0 %v23
    %65 = vmatpush1.msra.mxu0 %v22
    %66 = vmatprep.subr.mxu0 %v27
    %67 = vmatpush1.msra.mxu0 %v26
    %68 = vmatprep.subr.mxu0 %v31
    %69 = vmatpush1.msra.mxu0 %v30
    %70 = vmatprep.subr.mxu0 %v35
    %71 = vmatpush1.msra.mxu0 %v34
    %72 = vmatprep.subr.mxu0 0.0
    %73 = vmatpush1.msra.mxu0 0.0
    %74 = vmatprep.subr.mxu0 0.0
    %75 = vmatpush1.msra.mxu0 0.0
    %76 = vmatprep.subr.mxu0 0.0
    %77 = vmatpush1.msra.mxu0 0.0
    %78 = vmatprep.subr.mxu0 0.0
    %79 = vmatpush1.msra.mxu0 0.0
    %80 = vmatprep.subr.mxu0 0.0
    %81 = vmatpush1.msra.mxu0 0.0
    %82 = vmatprep.subr.mxu0 0.0
    %83 = vmatpush1.msra.mxu0 0.0
    %84 = vmatprep.subr.mxu0 0.0
    %85 = vmatpush1.msra.mxu0 0.0
    %86 = vmatprep.subr.mxu0 0.0
    %87 = vmatpush1.msra.mxu0 0.0
    %88 = vmatprep.subr.mxu0 0.0
    %89 = vmatpush1.msra.mxu0 0.0
    %90 = vmatprep.subr.mxu0 0.0
    %91 = vmatpush1.msra.mxu0 0.0
    %92 = vmatprep.subr.mxu0 0.0
    %93 = vmatpush1.msra.mxu0 0.0
    %94 = vmatprep.subr.mxu0 0.0
    %95 = vmatpush1.msra.mxu0 0.0
    %96 = vmatprep.subr.mxu0 0.0
    %97 = vmatpush1.msra.mxu0 0.0
    %98 = vmatprep.subr.mxu0 0.0
    %99 = vmatpush1.msra.mxu0 0.0
    %100 = vmatprep.subr.mxu0 0.0
    %101 = vmatpush1.msra.mxu0 0.0
    %102 = vmatprep.subr.mxu0 0.0
    %103 = vmatpush1.msra.mxu0 0.0
    %104 = vmatprep.subr.mxu0 0.0
    %105 = vmatpush1.msra.mxu0 0.0
    %106 = vmatprep.subr.mxu0 0.0
    %107 = vmatpush1.msra.mxu0 0.0
    %108 = vmatprep.subr.mxu0 0.0
    %109 = vmatpush1.msra.mxu0 0.0
    %110 = vmatprep.subr.mxu0 0.0
    %111 = vmatpush1.msra.mxu0 0.0
    %112 = vmatprep.subr.mxu0 0.0
    %113 = vmatpush1.msra.mxu0 0.0
    %114 = vmatprep.subr.mxu0 0.0
    %115 = vmatpush1.msra.mxu0 0.0
    %116 = vmatprep.subr.mxu0 0.0
    %117 = vmatpush1.msra.mxu0 0.0
    %118 = vmatprep.subr.mxu0 0.0
    %119 = vmatpush1.msra.mxu0 0.0
    %120 = vmatprep.subr.mxu0 0.0
    %121 = vmatpush1.msra.mxu0 0.0
    %122 = vmatprep.subr.mxu0 0.0
    %123 = vmatpush1.msra.mxu0 0.0
    %124 = vmatprep.subr.mxu0 0.0
    %125 = vmatpush1.msra.mxu0 0.0
    %126 = vmatprep.subr.mxu0 0.0
    %127 = vmatpush1.msra.mxu0 0.0
    %128 = vmatprep.mubr.f32.mxu0 0.0
    %129 = vmatmul.mubr.f32.gmra.mrb[0].mxu0 %v62
    %v130 = vpop.f32.mrb[0].mxu0
    %v131 = vadd.f32 %v43, %v130
    %v132 = vpop.f32.mrb[0].mxu0
    %v133 = vadd.f32 %v47, %v132
    %134 = vdwg.mxu0
    %135 = vmatprep.subr.mxu0 %v25
    %136 = vmatpush1.msra.mxu0 %v24
    %137 = vmatprep.subr.mxu0 %v29
    %138 = vmatpush1.msra.mxu0 %v28
    %139 = vmatprep.subr.mxu0 %v33
    %140 = vmatpush1.msra.mxu0 %v32
    %141 = vmatprep.subr.mxu0 %v37
    %142 = vmatpush1.msra.mxu0 %v36
    %143 = vmatprep.subr.mxu0 0.0
    %144 = vmatpush1.msra.mxu0 0.0
    %145 = vmatprep.subr.mxu0 0.0
    %146 = vmatpush1.msra.mxu0 0.0
    %147 = vmatprep.subr.mxu0 0.0
    %148 = vmatpush1.msra.mxu0 0.0
    %149 = vmatprep.subr.mxu0 0.0
    %150 = vmatpush1.msra.mxu0 0.0
    %151 = vmatprep.subr.mxu0 0.0
    %152 = vmatpush1.msra.mxu0 0.0
    %153 = vmatprep.subr.mxu0 0.0
    %154 = vmatpush1.msra.mxu0 0.0
    %155 = vmatprep.subr.mxu0 0.0
    %156 = vmatpush1.msra.mxu0 0.0
    %157 = vmatprep.subr.mxu0 0.0
    %158 = vmatpush1.msra.mxu0 0.0
    %159 = vmatprep.subr.mxu0 0.0
    %160 = vmatpush1.msra.mxu0 0.0
    %161 = vmatprep.subr.mxu0 0.0
    %162 = vmatpush1.msra.mxu0 0.0
    %163 = vmatprep.subr.mxu0 0.0
    %164 = vmatpush1.msra.mxu0 0.0
    %165 = vmatprep.subr.mxu0 0.0
    %166 = vmatpush1.msra.mxu0 0.0
    %167 = vmatprep.subr.mxu0 0.0
    %168 = vmatpush1.msra.mxu0 0.0
    %169 = vmatprep.subr.mxu0 0.0
    %170 = vmatpush1.msra.mxu0 0.0
    %171 = vmatprep.subr.mxu0 0.0
    %172 = vmatpush1.msra.mxu0 0.0
    %173 = vmatprep.subr.mxu0 0.0
    %174 = vmatpush1.msra.mxu0 0.0
    %175 = vmatprep.subr.mxu0 0.0
    %176 = vmatpush1.msra.mxu0 0.0
    %177 = vmatprep.subr.mxu0 0.0
    %178 = vmatpush1.msra.mxu0 0.0
    %179 = vmatprep.subr.mxu0 0.0
    %180 = vmatpush1.msra.mxu0 0.0
    %181 = vmatprep.subr.mxu0 0.0
    %182 = vmatpush1.msra.mxu0 0.0
    %183 = vmatprep.subr.mxu0 0.0
    %184 = vmatpush1.msra.mxu0 0.0
    %185 = vmatprep.subr.mxu0 0.0
    %186 = vmatpush1.msra.mxu0 0.0
    %187 = vmatprep.subr.mxu0 0.0
    %188 = vmatpush1.msra.mxu0 0.0
    %189 = vmatprep.subr.mxu0 0.0
    %190 = vmatpush1.msra.mxu0 0.0
    %191 = vmatprep.subr.mxu0 0.0
    %192 = vmatpush1.msra.mxu0 0.0
    %193 = vmatprep.subr.mxu0 0.0
    %194 = vmatpush1.msra.mxu0 0.0
    %195 = vmatprep.subr.mxu0 0.0
    %196 = vmatpush1.msra.mxu0 0.0
    %197 = vmatprep.subr.mxu0 0.0
    %198 = vmatpush1.msra.mxu0 0.0
    %199 = vmatprep.mubr.f32.mxu0 0.0
    %200 = vmatmul.mubr.f32.gmra.mrb[0].mxu0 %v62
    %v201 = vpop.f32.mrb[0].mxu0
    %v202 = vadd.f32 %v51, %v201
    %v203 = vpop.f32.mrb[0].mxu0
    %v204 = vadd.f32 %v55, %v203
    %205 = vdwg.mxu0
    %v206 = vtanh.pop %v131
    %v207 = vtanh.pop %v133
    %v208 = vtanh.pop %v202
    %v209 = vtanh.pop %v204
    %v210 = vld [vmem:[%s3] sm:$0xff]
    %v211 = vld [vmem:[%s3 + $0x8] sm:$0xff]
    %v212 = vld [vmem:[%s3 + $0x10] sm:$0xff]
    %v213 = vld [vmem:[%s3 + $0x18] sm:$0xff]
    %v214 = vld [vmem:[%s3 + $0x20] sm:$0xff]
    %v215 = vld [vmem:[%s3 + $0x28] sm:$0xff]
    %v216 = vld [vmem:[%s3 + $0x30] sm:$0xff]
    %v217 = vld [vmem:[%s3 + $0x38] sm:$0xff]
    %v218 = vld [vmem:[%s3 + $0x40] sm:$0xff]
    %v219 = vld [vmem:[%s3 + $0x48] sm:$0xff]
    %v220 = vld [vmem:[%s3 + $0x50] sm:$0xff]
    %v221 = vld [vmem:[%s3 + $0x58] sm:$0xff]
    %v222 = vld [vmem:[%s3 + $0x60] sm:$0xff]
    %v223 = vld [vmem:[%s3 + $0x68] sm:$0xff]
    %v224 = vld [vmem:[%s3 + $0x70] sm:$0xff]
    %v225 = vld [vmem:[%s3 + $0x78] sm:$0xff]
    %v226 = vld [vmem:[%s3 + $0x80] sm:$0xff]
    %v227 = vld [vmem:[%s3 + $0x88] sm:$0xff]
    %v228 = vld [vmem:[%s3 + $0x90] sm:$0xff]
    %v229 = vld [vmem:[%s3 + $0x98] sm:$0xff]
    %v230 = vld [vmem:[%s3 + $0xa0] sm:$0xff]
    %v231 = vld [vmem:[%s3 + $0xa8] sm:$0xff]
    %v232 = vld [vmem:[%s3 + $0xb0] sm:$0xff]
    %v233 = vld [vmem:[%s3 + $0xb8] sm:$0xff]
    %v234 = vld [vmem:[%s3 + $0xc0] sm:$0xff]
    %v235 = vld [vmem:[%s3 + $0xc8] sm:$0xff]
    %v236 = vld [vmem:[%s3 + $0xd0] sm:$0xff]
    %v237 = vld [vmem:[%s3 + $0xd8] sm:$0xff]
    %v238 = vld [vmem:[%s3 + $0xe0] sm:$0xff]
    %v239 = vld [vmem:[%s3 + $0xe8] sm:$0xff]
    %v240 = vld [vmem:[%s3 + $0xf0] sm:$0xff]
    %v241 = vld [vmem:[%s3 + $0xf8] sm:$0xff]
    %v242 = vld [vmem:[%s3 + $0x100] sm:$0xff]
    %v243 = vld [vmem:[%s3 + $0x108] sm:$0xff]
    %v244 = vld [vmem:[%s3 + $0x110] sm:$0xff]
    %v245 = vld [vmem:[%s3 + $0x118] sm:$0xff]
    %v246 = vld [vmem:[%s3 + $0x120] sm:$0xff]
    %v247 = vld [vmem:[%s3 + $0x128] sm:$0xff]
    %v248 = vld [vmem:[%s3 + $0x130] sm:$0xff]
    %v249 = vld [vmem:[%s3 + $0x138] sm:$0xff]
    %v250 = vld [vmem:[%s3 + $0x140] sm:$0xff]
    %v251 = vld [vmem:[%s3 + $0x148] sm:$0xff]
    %v252 = vld [vmem:[%s3 + $0x150] sm:$0xff]
    %v253 = vld [vmem:[%s3 + $0x158] sm:$0xff]
    %v254 = vld [vmem:[%s3 + $0x160] sm:$0xff]
    %v255 = vld [vmem:[%s3 + $0x168] sm:$0xff]
    %v256 = vld [vmem:[%s3 + $0x170] sm:$0xff]
    %v257 = vld [vmem:[%s3 + $0x178] sm:$0xff]
    %v258 = vld [vmem:[%s3 + $0x180] sm:$0xff]
    %v259 = vld [vmem:[%s3 + $0x188] sm:$0xff]
    %v260 = vld [vmem:[%s3 + $0x190] sm:$0xff]
    %v261 = vld [vmem:[%s3 + $0x198] sm:$0xff]
    %v262 = vld [vmem:[%s3 + $0x1a0] sm:$0xff]
    %v263 = vld [vmem:[%s3 + $0x1a8] sm:$0xff]
    %v264 = vld [vmem:[%s3 + $0x1b0] sm:$0xff]
    %v265 = vld [vmem:[%s3 + $0x1b8] sm:$0xff]
    %v266 = vld [vmem:[%s3 + $0x1c0] sm:$0xff]
    %v267 = vld [vmem:[%s3 + $0x1c8] sm:$0xff]
    %v268 = vld [vmem:[%s3 + $0x1d0] sm:$0xff]
    %v269 = vld [vmem:[%s3 + $0x1d8] sm:$0xff]
    %v270 = vld [vmem:[%s3 + $0x1e0] sm:$0xff]
    %v271 = vld [vmem:[%s3 + $0x1e8] sm:$0xff]
    %v272 = vld [vmem:[%s3 + $0x1f0] sm:$0xf]
    %v273 = vld [vmem:[%s4] sm:$0x1]
    %v275 = vlaneseq
    %v276 = vshrl.u32 %v275, 7
    %v277 = vsub.s32 0, %v276
    %v278 = vrot.slane %v273, %v277
    %vm280 = vcmask 949248
    %v282 = vsel %vm280, %v209, 0
    %vm284 = vcmask 1043456
    %v286 = vsel %vm284, %v272, 0
    %288 = vmatprep.subr.mxu0 0.0
    %289 = vmatpush1.msra.mxu0 %v210
    %290 = vmatprep.subr.mxu0 0.0
    %291 = vmatpush1.msra.mxu0 %v211
    %292 = vmatprep.subr.mxu0 0.0
    %293 = vmatpush1.msra.mxu0 %v212
    %294 = vmatprep.subr.mxu0 0.0
    %295 = vmatpush1.msra.mxu0 %v213
    %296 = vmatprep.subr.mxu0 0.0
    %297 = vmatpush1.msra.mxu0 %v214
    %298 = vmatprep.subr.mxu0 0.0
    %299 = vmatpush1.msra.mxu0 %v215
    %300 = vmatprep.subr.mxu0 0.0
    %301 = vmatpush1.msra.mxu0 %v216
    %302 = vmatprep.subr.mxu0 0.0
    %303 = vmatpush1.msra.mxu0 %v217
    %304 = vmatprep.subr.mxu0 0.0
    %305 = vmatpush1.msra.mxu0 %v218
    %306 = vmatprep.subr.mxu0 0.0
    %307 = vmatpush1.msra.mxu0 %v219
    %308 = vmatprep.subr.mxu0 0.0
    %309 = vmatpush1.msra.mxu0 %v220
    %310 = vmatprep.subr.mxu0 0.0
    %311 = vmatpush1.msra.mxu0 %v221
    %312 = vmatprep.subr.mxu0 0.0
    %313 = vmatpush1.msra.mxu0 %v222
    %314 = vmatprep.subr.mxu0 0.0
    %315 = vmatpush1.msra.mxu0 %v223
    %316 = vmatprep.subr.mxu0 0.0
    %317 = vmatpush1.msra.mxu0 %v224
    %318 = vmatprep.subr.mxu0 0.0
    %319 = vmatpush1.msra.mxu0 %v225
    %320 = vmatprep.subr.mxu0 0.0
    %321 = vmatpush1.msra.mxu0 %v226
    %322 = vmatprep.subr.mxu0 0.0
    %323 = vmatpush1.msra.mxu0 %v227
    %324 = vmatprep.subr.mxu0 0.0
    %325 = vmatpush1.msra.mxu0 %v228
    %326 = vmatprep.subr.mxu0 0.0
    %327 = vmatpush1.msra.mxu0 %v229
    %328 = vmatprep.subr.mxu0 0.0
    %329 = vmatpush1.msra.mxu0 %v230
    %330 = vmatprep.subr.mxu0 0.0
    %331 = vmatpush1.msra.mxu0 %v231
    %332 = vmatprep.subr.mxu0 0.0
    %333 = vmatpush1.msra.mxu0 %v232
    %334 = vmatprep.subr.mxu0 0.0
    %335 = vmatpush1.msra.mxu0 %v233
    %336 = vmatprep.subr.mxu0 0.0
    %337 = vmatpush1.msra.mxu0 %v234
    %338 = vmatprep.subr.mxu0 0.0
    %339 = vmatpush1.msra.mxu0 %v235
    %340 = vmatprep.subr.mxu0 0.0
    %341 = vmatpush1.msra.mxu0 %v236
    %342 = vmatprep.subr.mxu0 0.0
    %343 = vmatpush1.msra.mxu0 %v237
    %344 = vmatprep.subr.mxu0 0.0
    %345 = vmatpush1.msra.mxu0 %v238
    %346 = vmatprep.subr.mxu0 0.0
    %347 = vmatpush1.msra.mxu0 %v239
    %348 = vmatprep.subr.mxu0 0.0
    %349 = vmatpush1.msra.mxu0 %v240
    %350 = vmatprep.subr.mxu0 0.0
    %351 = vmatpush1.msra.mxu0 %v241
    %352 = vmatprep.mubr.f32.mxu0 %v207
    %353 = vmatmul.mubr.f32.gmra.mrb[0].mxu0 %v206
    %v354 = vpop.f32.mrb[0].mxu0
    %v355 = vadd.f32 %v278, %v354
    %v356 = vpop.f32.mrb[0].mxu0
    %357 = vdwg.mxu0
    %358 = vmatprep.subr.mxu0 0.0
    %359 = vmatpush1.msra.mxu0 %v242
    %360 = vmatprep.subr.mxu0 0.0
    %361 = vmatpush1.msra.mxu0 %v243
    %362 = vmatprep.subr.mxu0 0.0
    %363 = vmatpush1.msra.mxu0 %v244
    %364 = vmatprep.subr.mxu0 0.0
    %365 = vmatpush1.msra.mxu0 %v245
    %366 = vmatprep.subr.mxu0 0.0
    %367 = vmatpush1.msra.mxu0 %v246
    %368 = vmatprep.subr.mxu0 0.0
    %369 = vmatpush1.msra.mxu0 %v247
    %370 = vmatprep.subr.mxu0 0.0
    %371 = vmatpush1.msra.mxu0 %v248
    %372 = vmatprep.subr.mxu0 0.0
    %373 = vmatpush1.msra.mxu0 %v249
    %374 = vmatprep.subr.mxu0 0.0
    %375 = vmatpush1.msra.mxu0 %v250
    %376 = vmatprep.subr.mxu0 0.0
    %377 = vmatpush1.msra.mxu0 %v251
    %378 = vmatprep.subr.mxu0 0.0
    %379 = vmatpush1.msra.mxu0 %v252
    %380 = vmatprep.subr.mxu0 0.0
    %381 = vmatpush1.msra.mxu0 %v253
    %382 = vmatprep.subr.mxu0 0.0
    %383 = vmatpush1.msra.mxu0 %v254
    %384 = vmatprep.subr.mxu0 0.0
    %385 = vmatpush1.msra.mxu0 %v255
    %386 = vmatprep.subr.mxu0 0.0
    %387 = vmatpush1.msra.mxu0 %v256
    %388 = vmatprep.subr.mxu0 0.0
    %389 = vmatpush1.msra.mxu0 %v257
    %390 = vmatprep.subr.mxu0 0.0
    %391 = vmatpush1.msra.mxu0 %v258
    %392 = vmatprep.subr.mxu0 0.0
    %393 = vmatpush1.msra.mxu0 %v259
    %394 = vmatprep.subr.mxu0 0.0
    %395 = vmatpush1.msra.mxu0 %v260
    %396 = vmatprep.subr.mxu0 0.0
    %397 = vmatpush1.msra.mxu0 %v261
    %398 = vmatprep.subr.mxu0 0.0
    %399 = vmatpush1.msra.mxu0 %v262
    %400 = vmatprep.subr.mxu0 0.0
    %401 = vmatpush1.msra.mxu0 %v263
    %402 = vmatprep.subr.mxu0 0.0
    %403 = vmatpush1.msra.mxu0 %v264
    %404 = vmatprep.subr.mxu0 0.0
    %405 = vmatpush1.msra.mxu0 %v265
    %406 = vmatprep.subr.mxu0 0.0
    %407 = vmatpush1.msra.mxu0 %v266
    %408 = vmatprep.subr.mxu0 0.0
    %409 = vmatpush1.msra.mxu0 %v267
    %410 = vmatprep.subr.mxu0 0.0
    %411 = vmatpush1.msra.mxu0 %v268
    %412 = vmatprep.subr.mxu0 0.0
    %413 = vmatpush1.msra.mxu0 %v269
    %414 = vmatprep.subr.mxu0 0.0
    %415 = vmatpush1.msra.mxu0 %v270
    %416 = vmatprep.subr.mxu0 0.0
    %417 = vmatpush1.msra.mxu0 %v271
    %418 = vmatprep.subr.mxu0 0.0
    %419 = vmatpush1.msra.mxu0 %v286
    %420 = vmatprep.subr.mxu0 0.0
    %421 = vmatpush1.msra.mxu0 0.0
    %422 = vmatprep.mubr.f32.mxu0 %v282
    %423 = vmatmul.mubr.f32.gmra.mrb[0].mxu0 %v208
    %v424 = vpop.f32.mrb[0].mxu0
    %v425 = vadd.f32 %v355, %v424
    %v426 = vpop.f32.mrb[0].mxu0
    %427 = vdwg.mxu0
    %v428 = vlaneseq
    %v429 = vand.u32 %v428, 127
    %vm430 = vcmp.lt.s32.totalorder %v429, 8
    %v431 = vtanh.pop %v425
    %v432 = vmul.f32 %v425, 1.442695
    %v433 = vpow.pop %v432
    %v434 = vsel %vm430, %v431, %v433
    %vm435 = vcmask 130048
    %436 = vst.msk [vmem:[#allocation2] sm:$0xff] %vm435, %v434
    // Predicated region
    $region22: #{tpu_custom_call.1} parent=1 // pred_check
      _
    $region23: #{tpu_custom_call.1} parent=1 // pred_check_branch
      %438 = sbr.rel (0) target = $region25
    $region24: #{tpu_custom_call.1} parent=1 // pred_region
      %s440 = ssub.s32 128, 128
      %441 = vsyncadd [#allocation3], %s440
      %s443 = sshll.u32 [#allocation2], 4
      %s444 = int_to_ptr.vmem [resolvable:$true] %s443
      %446 = dma.vmem_to_hbm [thread:$0]  %s444, 128, %s5, [#allocation3]
    $region25: #{tpu_custom_call.1} parent=1 // pred_fallthru
      _
    // Predicated region
    $region26: #{tpu_custom_call.1} parent=1 // pred_check
      _
    $region27: #{tpu_custom_call.1} parent=1 // pred_check_branch
      %448 = sbr.rel (0) target = $region29
    $region28: #{tpu_custom_call.1} parent=1 // pred_region
      %449 = dma.done [#allocation3], 128
    $region29: #{tpu_custom_call.1} parent=1 // pred_fallthru
      _
    %450 = vsyncpa [#allocation3], 1

</llo_original>
